<compile_context>
chip_gen: v5e
topology: v5e:2x2
jax: 0.10.0
libtpu: 0.0.40
codegen_flags: <defaults>
</compile_context>

<pallas_src>
import functools
from dataclasses import dataclass
from typing import Optional

import jax
import jax.numpy as jnp
from jax.experimental import pallas as pl
from jax.experimental.pallas import tpu as pltpu


_NEG_BIG = -1e30  # additive mask bias; large enough that exp() underflows to exactly 0


# --------------------------------------------------------------------------- #
# Kernel
# --------------------------------------------------------------------------- #
def _attention_kernel(*refs, apply_tanh: bool, apply_general: bool,
                      ignore_small: float):
    """Fused attention for one batch tile.

    refs (in order):
      q_ref     : (TB, D)      decoder hidden state (f32)
      ctx_ref   : (TB, S, E)   encoder context (f32 or bf16)
      bias_ref  : (TB, S)      additive mask bias (0 / -1e30, f32)
      wgen_ref  : (D, D)       general-attention projection, input-major  [general only]
      w_ref     : (D+E, Dout)  fused transform_linear weight, input-major (resident)
      b_ref     : (1, Dout)    transform_linear bias (zeros for dot/general)
      final_ref, probs_ref, content_ref : outputs
    """
    if apply_general:
        (q_ref, ctx_ref, bias_ref, wgen_ref, w_ref, b_ref,
         final_ref, probs_ref, content_ref) = refs
    else:
        (q_ref, ctx_ref, bias_ref, w_ref, b_ref,
         final_ref, probs_ref, content_ref) = refs

    q = q_ref[...].astype(jnp.float32)           # (TB, D)
    ctx = ctx_ref[...].astype(jnp.float32)       # (TB, S, E)

    # 'general': matrix_in projection folded in-kernel (MXU, resident weight).
    if apply_general:
        q_s = jnp.dot(q, wgen_ref[...], preferred_element_type=jnp.float32)
    else:
        q_s = q

    # scores[b, s] = sum_e q_s[b, e] * ctx[b, s, e]
    # NOTE: batched per-example mat-vec -> MXU M dim would be 1 and a batched
    # dot_general unrolls into TB tiny matmuls; keep it on VPU multiply + XLU reduce.
    scores = jnp.sum(q_s[:, None, :] * ctx, axis=-1)        # (TB, S)
    scores = scores + bias_ref[...]                         # masked_fill via additive bias

    # numerically-stable softmax over encoder_step (axis kept whole inside the block)
    m = jnp.max(scores, axis=-1, keepdims=True)
    e = jnp.exp(scores - m)
    probs = e / jnp.sum(e, axis=-1, keepdims=True)

    if ignore_small > 0.0:  # nn.functional.threshold(probs, ignore_small, 0)
        probs = jnp.where(probs > ignore_small, probs, 0.0)

    # content[b, e] = sum_s probs[b, s] * ctx[b, s, e]   (batched vec-mat, same note)
    content = jnp.sum(probs[:, :, None] * ctx, axis=1)      # (TB, E)

    # transform_linear(concat([inputs, content])) as ONE fused K=D+E contraction,
    # split over the K axis against a single resident weight (no in-kernel lane concat):
    #   final = q @ W[:D] + content @ W[D:] + b        (MXU, f32 accumulation)
    D = q.shape[-1]
    w = w_ref[...]
    final = (jnp.dot(q, w[:D, :], preferred_element_type=jnp.float32)
             + jnp.dot(content, w[D:, :], preferred_element_type=jnp.float32)
             + b_ref[...])

    # TODO(synk): original PyTorch calls `nn.Tanh(final_h)` (constructs a module — a
    # bug); apply elementwise tanh, the clearly intended semantics.
    if apply_tanh:
        final = jnp.tanh(final)

    final_ref[...] = final.astype(final_ref.dtype)
    probs_ref[...] = probs.astype(probs_ref.dtype)
    content_ref[...] = content.astype(content_ref.dtype)


# --------------------------------------------------------------------------- #
# Device-dependent defaults and tile sizing
# --------------------------------------------------------------------------- #
def _device_defaults():
    """Pick context compute dtype + target batch tile from the local TPU generation."""
    kind = ""
    try:
        kind = jax.devices()[0].device_kind.lower()
    except Exception:
        pass
    newer = any(tag in kind for tag in ("v6", "v7", "tpu7"))
    # v6e/v7x: bf16 context halves the dominant HBM stream (f32 accumulation in-kernel).
    # v5e and older: keep f32 (no native bf16 VPU/EUP).
    ctx_dtype = jnp.bfloat16 if newer else jnp.float32
    target_bb = 256 if newer else 128
    return ctx_dtype, target_bb


def _pick_block_b(B, S, E, D, Dout, ctx_itemsize, target):
    """Batch tile: as large as the VMEM budget allows, multiple of 8, grid >= 2 if possible."""
    # Per batch row: double-buffered ctx tile + in-kernel f32 copy / broadcast temp
    # + the small double-buffered per-row vectors.
    per_row = S * E * (2 * ctx_itemsize + 12) + 8 * (D + Dout + 2 * S + E) + 64
    budget = 20 * 1024 * 1024            # stay comfortably under the 32 MiB scoped VMEM
    vmem_cap = max(8, (budget // per_row) // 8 * 8)

    bb = min(int(target), int(vmem_cap))
    b8 = max(8, ((B + 7) // 8) * 8)      # batch rounded up to a sublane multiple
    bb = min(bb, b8)
    if B > 8:
        # Keep >= 2 grid blocks so the "parallel" batch axis can shard across both
        # TensorCores (v7x) / pipeline across grid steps.
        half = max(8, (((B + 1) // 2) + 7) // 8 * 8)
        bb = min(bb, half)
    return int(bb)


# --------------------------------------------------------------------------- #
# Wrapper: grid over batch (parallel), batch padded to the tile size
# --------------------------------------------------------------------------- #
@functools.partial(
    jax.jit,
    static_argnames=("apply_tanh", "apply_general", "ignore_small", "target_block_b"))
def _attention_pallas(q, ctx, mask_bias, wgen, w_full, b, *,
                      apply_tanh: bool, apply_general: bool,
                      ignore_small: float, target_block_b: int):
    B, D = q.shape
    _, S, E = ctx.shape
    Dout = w_full.shape[1]

    block_b = _pick_block_b(B, S, E, D, Dout,
                            jnp.dtype(ctx.dtype).itemsize, target_block_b)
    num_blocks = pl.cdiv(B, block_b)
    Bp = num_blocks * block_b
    if Bp != B:
        pad = Bp - B
        q = jnp.pad(q, ((0, pad), (0, 0)))
        ctx = jnp.pad(ctx, ((0, pad), (0, 0), (0, 0)))
        # padded rows get bias 0 -> finite uniform softmax; rows are sliced off below
        mask_bias = jnp.pad(mask_bias, ((0, pad), (0, 0)))

    kernel = functools.partial(_attention_kernel,
                               apply_tanh=apply_tanh,
                               apply_general=apply_general,
                               ignore_small=float(ignore_small))

    in_specs = [
        pl.BlockSpec((block_b, D), lambda i: (i, 0)),        # q (inputs)
        pl.BlockSpec((block_b, S, E), lambda i: (i, 0, 0)),  # context (dominant stream)
        pl.BlockSpec((block_b, S), lambda i: (i, 0)),        # additive mask bias
    ]
    inputs = [q, ctx, mask_bias]
    if apply_general:
        in_specs.append(pl.BlockSpec((D, D), lambda i: (0, 0)))   # resident W_general
        inputs.append(wgen)
    in_specs += [
        pl.BlockSpec((D + E, Dout), lambda i: (0, 0)),       # resident fused weight
        pl.BlockSpec((1, Dout), lambda i: (0, 0)),           # resident bias
    ]
    inputs += [w_full, b]

    ctx_bytes = jnp.dtype(ctx.dtype).itemsize
    flops = Bp * (4 * S * E + 2 * (D + E) * Dout
                  + (2 * D * D if apply_general else 0))
    transcendentals = Bp * S + (Bp * Dout if apply_tanh else 0)
    bytes_accessed = (Bp * (D * 4 + S * E * ctx_bytes + S * 4)          # inputs
                      + (D + E) * Dout * 4 + Dout * 4
                      + (D * D * 4 if apply_general else 0)             # weights
                      + Bp * (Dout + S + E) * 4)                        # outputs

    # TODO(synk): on v5e the (Bp,S)/(Bp,E) outputs have <128 live lanes (masked vst);
    # if probs/content are consumed downstream at scale, present them lane-transposed.
    final_p, probs_p, content_p = pl.pallas_call(
        kernel,
        out_shape=(
            jax.ShapeDtypeStruct((Bp, Dout), jnp.float32),   # final_h
            jax.ShapeDtypeStruct((Bp, S), jnp.float32),      # scores (post-softmax)
            jax.ShapeDtypeStruct((Bp, E), jnp.float32),      # content
        ),
        grid=(num_blocks,),
        in_specs=in_specs,
        out_specs=(
            pl.BlockSpec((block_b, Dout), lambda i: (i, 0)),
            pl.BlockSpec((block_b, S), lambda i: (i, 0)),
            pl.BlockSpec((block_b, E), lambda i: (i, 0)),
        ),
        compiler_params=pltpu.CompilerParams(
            dimension_semantics=("parallel",),
            vmem_limit_bytes=32 * 1024 * 1024),
        cost_estimate=pl.CostEstimate(flops=flops,
                                      transcendentals=transcendentals,
                                      bytes_accessed=bytes_accessed),
    )(*inputs)

    return final_p[:B], probs_p[:B], content_p[:B]


# --------------------------------------------------------------------------- #
# Module port
# --------------------------------------------------------------------------- #
@dataclass
class AttentionConfig:
    attn_type: str = "dot"
    decoder_hidden_dim: int = 32
    encoder_hidden_dim: int = 32
    attn_hidden_dim: Optional[int] = None


class AttentionPallas:
    """JAX/Pallas port of django.model.Attention (forward pass only)."""

    def __init__(self, config: AttentionConfig, *, key,
                 ctx_dtype=None, target_block_b=None):
        self.attn_type = config.attn_type
        assert self.attn_type in ("dot", "general", "mlp"), "wrong attention type"
        self.input_dim = config.decoder_hidden_dim
        self.context_dim = config.encoder_hidden_dim
        self.attn_hidden_dim = config.attn_hidden_dim

        if self.attn_hidden_dim is not None or self.attn_type == "mlp":
            # TODO(synk): the optional attn_hidden_dim transform and the 'mlp' scoring
            # path are not ported to Pallas; only 'dot'/'general' with
            # attn_hidden_dim=None are implemented.
            raise NotImplementedError(
                "AttentionPallas supports attn_type in ('dot','general') with "
                "attn_hidden_dim=None")

        auto_dtype, auto_bb = _device_defaults()
        self.ctx_dtype = auto_dtype if ctx_dtype is None else ctx_dtype
        self.target_block_b = int(auto_bb if target_block_b is None else target_block_b)

        D, E = self.input_dim, self.context_dim
        k_gen, k_out = jax.random.split(key)

        # matrix_in (general only): nn.Linear(D, D, bias=False), U(-1/sqrt(D), 1/sqrt(D))
        if self.attn_type == "general":
            bound_g = 1.0 / (D ** 0.5)
            w_gen = jax.random.uniform(k_gen, (D, D), jnp.float32, -bound_g, bound_g)
            self.matrix_in_w = w_gen                  # PyTorch layout (out, in)
            self.wgen_in = jnp.transpose(w_gen)       # input-major for the kernel
        else:
            self.matrix_in_w = None
            self.wgen_in = None

        # transform_linear: nn.Linear(D + E, D, bias=(attn_type == 'mlp'))
        bound_o = 1.0 / ((D + E) ** 0.5)
        w_out = jax.random.uniform(
            k_out, (D, D + E), jnp.float32, -bound_o, bound_o)  # PyTorch (out, in)
        self.w_full = jnp.transpose(w_out)            # (D+E, D), input-major (fused K)
        self.bias = jnp.zeros((1, D), jnp.float32)    # no bias for dot/general

    def forward(self, inputs, context, context_mask=None, ignore_small=0):
        assert inputs.ndim == 2 and context.ndim == 3
        ctx = jnp.transpose(context, (1, 0, 2))  # (B, S, E)
        B, S, E = ctx.shape
        B_, D = inputs.shape
        assert B == B_
        assert context_mask is not None and context_mask.shape == (B, S)

        # masked_fill_(mask, -inf) realized as an additive large-negative bias
        mask_bias = jnp.where(context_mask,
                              jnp.float32(_NEG_BIG), jnp.float32(0.0))
        apply_tanh = self.attn_type in ("dot", "general")

        final_h, scores, content = _attention_pallas(
            inputs.astype(jnp.float32),
            ctx.astype(self.ctx_dtype),
            mask_bias,
            self.wgen_in, self.w_full, self.bias,
            apply_tanh=apply_tanh,
            apply_general=(self.attn_type == "general"),
            ignore_small=float(ignore_small),
            target_block_b=self.target_block_b)
        return final_h, scores, content

    __call__ = forward


# --------------------------------------------------------------------------- #
# Demo / self-check
# --------------------------------------------------------------------------- #
if __name__ == "__main__":
    batch = 16
    encoder_step = 8
    decoder_hidden_dim = 32
    encoder_hidden_dim = 32  # 'dot'/'general' require decoder dim == encoder dim

    key = jax.random.PRNGKey(0)
    k_mod, k_in, k_ctx, k_len, k_mod2 = jax.random.split(key, 5)

    inputs = jax.random.normal(k_in, (batch, decoder_hidden_dim), jnp.float32)
    # context is PyTorch-style (encoder_step, batch, encoder_hidden_dim)
    context = jax.random.normal(
        k_ctx, (encoder_step, batch, encoder_hidden_dim), jnp.float32)
    # boolean mask, True = masked; every row keeps at least 4 valid positions
    lengths = jax.random.randint(k_len, (batch,), 4, encoder_step + 1)
    context_mask = jnp.arange(encoder_step)[None, :] >= lengths[:, None]

    def reference(model, attn_type):
        ctx_bse = jnp.transpose(context, (1, 0, 2))
        # reference uses the same context rounding as the kernel's compute dtype
        ctx_q = ctx_bse.astype(model.ctx_dtype).astype(jnp.float32)
        if attn_type == "general":
            q_s = jnp.dot(inputs, jnp.transpose(model.matrix_in_w))
        else:
            q_s = inputs
        sc = jnp.sum(q_s[:, None, :] * ctx_q, axis=-1)
        sc = jnp.where(context_mask, -jnp.inf, sc)
        probs = jax.nn.softmax(sc, axis=-1)
        content = jnp.sum(probs[:, :, None] * ctx_q, axis=1)
        concat = jnp.concatenate([inputs, content], axis=1)
        final = jnp.tanh(
            jnp.dot(concat, model.w_full, precision=jax.lax.Precision.HIGHEST)
            + model.bias)
        return final, probs, content

    for attn_type, k in (("dot", k_mod), ("general", k_mod2)):
        cfg = AttentionConfig(attn_type=attn_type,
                              decoder_hidden_dim=decoder_hidden_dim,
                              encoder_hidden_dim=encoder_hidden_dim,
                              attn_hidden_dim=None)
        model = AttentionPallas(cfg, key=k)

        final_h, scores, content = model(inputs, context, context_mask,
                                         ignore_small=0)
        final_h = jax.block_until_ready(final_h)
        scores = jax.block_until_ready(scores)
        content = jax.block_until_ready(content)

        assert final_h.shape == (batch, decoder_hidden_dim)
        assert scores.shape == (batch, encoder_step)
        assert content.shape == (batch, encoder_hidden_dim)

        ref_final, ref_probs, ref_content = reference(model, attn_type)

        assert bool(jnp.allclose(scores.sum(-1), 1.0, atol=1e-4))
        assert bool(jnp.all(jnp.where(context_mask, scores, 0.0) == 0.0))
        assert bool(jnp.allclose(scores, ref_probs, atol=2e-4, rtol=2e-4))
        assert bool(jnp.allclose(content, ref_content, atol=2e-4, rtol=2e-4))
        assert bool(jnp.allclose(final_h, ref_final, atol=2e-4, rtol=2e-4))

    print("KERNEL_OK")
</pallas_src>

<mosaic_0001>
module attributes {stable_mosaic.version = 11 : i64} {
  func.func @_attention_kernel(%arg0: i32, %arg1: memref<8x32xf32, #tpu.memory_space<vmem>>, %arg2: memref<8x8x32xf32, #tpu.memory_space<vmem>>, %arg3: memref<8x8xf32, #tpu.memory_space<vmem>>, %arg4: memref<64x32xf32, #tpu.memory_space<vmem>>, %arg5: memref<1x32xf32, #tpu.memory_space<vmem>>, %arg6: memref<8x32xf32, #tpu.memory_space<vmem>>, %arg7: memref<8x8xf32, #tpu.memory_space<vmem>>, %arg8: memref<8x32xf32, #tpu.memory_space<vmem>>) attributes {dimension_semantics = [#tpu.dimension_semantics<parallel>], iteration_bounds = array<i64: 2>, scalar_prefetch = 0 : i64, scratch_operands = 0 : i64, tpu.core_type = #tpu.core_type<tc>, window_params = [{transform_indices = @transform_0, window_bounds = array<i64: 8, 32>}, {transform_indices = @transform_1, window_bounds = array<i64: 8, 8, 32>}, {transform_indices = @transform_2, window_bounds = array<i64: 8, 8>}, {pipeline_mode = #tpu.pipeline_mode<synchronous>, transform_indices = @transform_3, window_bounds = array<i64: 64, 32>}, {pipeline_mode = #tpu.pipeline_mode<synchronous>, transform_indices = @transform_4, window_bounds = array<i64: 1, 32>}, {transform_indices = @transform_5, window_bounds = array<i64: 8, 32>}, {transform_indices = @transform_6, window_bounds = array<i64: 8, 8>}, {transform_indices = @transform_7, window_bounds = array<i64: 8, 32>}]} {
    %c0 = arith.constant 0 : index
    %c0_0 = arith.constant 0 : index
    %0 = vector.load %arg1[%c0, %c0_0] : memref<8x32xf32, #tpu.memory_space<vmem>>, vector<8x32xf32>
    %c0_1 = arith.constant 0 : index
    %c0_2 = arith.constant 0 : index
    %c0_3 = arith.constant 0 : index
    %1 = vector.load %arg2[%c0_1, %c0_2, %c0_3] : memref<8x8x32xf32, #tpu.memory_space<vmem>>, vector<8x8x32xf32>
    %2 = vector.shape_cast %0 : vector<8x32xf32> to vector<8x1x32xf32>
    %3 = vector.broadcast %2 : vector<8x1x32xf32> to vector<8x8x32xf32>
    %4 = arith.mulf %3, %1 : vector<8x8x32xf32>
    %cst = arith.constant dense<0.000000e+00> : vector<8x8xf32>
    %5 = vector.multi_reduction <add>, %4, %cst [2] : vector<8x8x32xf32> to vector<8x8xf32>
    %c0_4 = arith.constant 0 : index
    %c0_5 = arith.constant 0 : index
    %6 = vector.load %arg3[%c0_4, %c0_5] : memref<8x8xf32, #tpu.memory_space<vmem>>, vector<8x8xf32>
    %7 = arith.addf %5, %6 : vector<8x8xf32>
    %cst_6 = arith.constant dense<0xFF800000> : vector<8xf32>
    %8 = vector.multi_reduction <maximumf>, %7, %cst_6 [1] : vector<8x8xf32> to vector<8xf32>
    %9 = vector.shape_cast %8 : vector<8xf32> to vector<8x1xf32>
    %10 = vector.broadcast %9 : vector<8x1xf32> to vector<8x8xf32>
    %11 = arith.subf %7, %10 : vector<8x8xf32>
    %12 = math.exp %11 : vector<8x8xf32>
    %cst_7 = arith.constant dense<0.000000e+00> : vector<8xf32>
    %13 = vector.multi_reduction <add>, %12, %cst_7 [1] : vector<8x8xf32> to vector<8xf32>
    %14 = vector.shape_cast %13 : vector<8xf32> to vector<8x1xf32>
    %15 = vector.broadcast %14 : vector<8x1xf32> to vector<8x8xf32>
    %16 = arith.divf %12, %15 : vector<8x8xf32>
    %17 = vector.shape_cast %16 : vector<8x8xf32> to vector<8x8x1xf32>
    %18 = vector.broadcast %17 : vector<8x8x1xf32> to vector<8x8x32xf32>
    %19 = arith.mulf %18, %1 : vector<8x8x32xf32>
    %cst_8 = arith.constant dense<0.000000e+00> : vector<8x32xf32>
    %20 = vector.multi_reduction <add>, %19, %cst_8 [1] : vector<8x8x32xf32> to vector<8x32xf32>
    %c0_9 = arith.constant 0 : index
    %c0_10 = arith.constant 0 : index
    %21 = vector.load %arg4[%c0_9, %c0_10] : memref<64x32xf32, #tpu.memory_space<vmem>>, vector<64x32xf32>
    %22 = vector.extract_strided_slice %21 {offsets = [0, 0], sizes = [32, 32], strides = [1, 1]} : vector<64x32xf32> to vector<32x32xf32>
    %cst_11 = arith.constant dense<0.000000e+00> : vector<8x32xf32>
    %23 = tpu.matmul %0, %22, %cst_11 {dimension_numbers = #tpu.dot_dimension_numbers<[1], [0], [0], [1], [0, 0, 1, 1], [], []>} : vector<8x32xf32>, vector<32x32xf32>, vector<8x32xf32> -> vector<8x32xf32>
    %24 = vector.extract_strided_slice %21 {offsets = [32, 0], sizes = [32, 32], strides = [1, 1]} : vector<64x32xf32> to vector<32x32xf32>
    %cst_12 = arith.constant dense<0.000000e+00> : vector<8x32xf32>
    %25 = tpu.matmul %20, %24, %cst_12 {dimension_numbers = #tpu.dot_dimension_numbers<[1], [0], [0], [1], [0, 0, 1, 1], [], []>} : vector<8x32xf32>, vector<32x32xf32>, vector<8x32xf32> -> vector<8x32xf32>
    %26 = arith.addf %23, %25 : vector<8x32xf32>
    %c0_13 = arith.constant 0 : index
    %c0_14 = arith.constant 0 : index
    %27 = vector.load %arg5[%c0_13, %c0_14] : memref<1x32xf32, #tpu.memory_space<vmem>>, vector<1x32xf32>
    %28 = vector.broadcast %27 : vector<1x32xf32> to vector<8x32xf32>
    %29 = arith.addf %26, %28 : vector<8x32xf32>
    %30 = math.tanh %29 : vector<8x32xf32>
    %c0_15 = arith.constant 0 : index
    %c0_16 = arith.constant 0 : index
    %31 = vector.load %arg6[%c0_15, %c0_16] : memref<8x32xf32, #tpu.memory_space<vmem>>, vector<8x32xf32>
    tpu.vector_store %arg6[%c0_15, %c0_16], %30 {strides = array<i32>} : memref<8x32xf32, #tpu.memory_space<vmem>>, vector<8x32xf32>,
    %c0_17 = arith.constant 0 : index
    %c0_18 = arith.constant 0 : index
    %32 = vector.load %arg7[%c0_17, %c0_18] : memref<8x8xf32, #tpu.memory_space<vmem>>, vector<8x8xf32>
    tpu.vector_store %arg7[%c0_17, %c0_18], %16 {strides = array<i32>} : memref<8x8xf32, #tpu.memory_space<vmem>>, vector<8x8xf32>,
    %c0_19 = arith.constant 0 : index
    %c0_20 = arith.constant 0 : index
    %33 = vector.load %arg8[%c0_19, %c0_20] : memref<8x32xf32, #tpu.memory_space<vmem>>, vector<8x32xf32>
    tpu.vector_store %arg8[%c0_19, %c0_20], %20 {strides = array<i32>} : memref<8x32xf32, #tpu.memory_space<vmem>>, vector<8x32xf32>,
    return
  }
  func.func @transform_0(%arg0: i32) -> (i32, i32) {
    %c0_i32 = arith.constant 0 : i32
    %c0_i32_0 = arith.constant 0 : i32
    return %arg0, %c0_i32 : i32, i32
  }
  func.func @transform_1(%arg0: i32) -> (i32, i32, i32) {
    %c0_i32 = arith.constant 0 : i32
    %c0_i32_0 = arith.constant 0 : i32
    %c0_i32_1 = arith.constant 0 : i32
    return %arg0, %c0_i32, %c0_i32_0 : i32, i32, i32
  }
  func.func @transform_2(%arg0: i32) -> (i32, i32) {
    %c0_i32 = arith.constant 0 : i32
    %c0_i32_0 = arith.constant 0 : i32
    return %arg0, %c0_i32 : i32, i32
  }
  func.func @transform_3(%arg0: i32) -> (i32, i32) {
    %c0_i32 = arith.constant 0 : i32
    %c0_i32_0 = arith.constant 0 : i32
    %c0_i32_1 = arith.constant 0 : i32
    return %c0_i32, %c0_i32_0 : i32, i32
  }
  func.func @transform_4(%arg0: i32) -> (i32, i32) {
    %c0_i32 = arith.constant 0 : i32
    %c0_i32_0 = arith.constant 0 : i32
    %c0_i32_1 = arith.constant 0 : i32
    return %c0_i32, %c0_i32_0 : i32, i32
  }
  func.func @transform_5(%arg0: i32) -> (i32, i32) {
    %c0_i32 = arith.constant 0 : i32
    %c0_i32_0 = arith.constant 0 : i32
    return %arg0, %c0_i32 : i32, i32
  }
  func.func @transform_6(%arg0: i32) -> (i32, i32) {
    %c0_i32 = arith.constant 0 : i32
    %c0_i32_0 = arith.constant 0 : i32
    return %arg0, %c0_i32 : i32, i32
  }
  func.func @transform_7(%arg0: i32) -> (i32, i32) {
    %c0_i32 = arith.constant 0 : i32
    %c0_i32_0 = arith.constant 0 : i32
    return %arg0, %c0_i32 : i32, i32
  }
}

</mosaic_0001>

<llo_original>
// kernel: _attention_pallas.1
$region0: #{_attention_pallas.1}
  #allocation0 [shape = 'u32[]', space=smem, size = 0x4, offset = 0x4, fixed_abs, tag = 'smem constant byte address 0x4 - core index']
  #allocation1 [shape = 'u32[72,128]{1,0:T(1,128)}', space=vmem, size = 0x9000, scoped, tag = 'internal scratch']
  %s0 = inlined_call_operand.vmem [shape: f32[16,32], index: 0, kind: input, shape index: {}]
  %s1 = inlined_call_operand.hbm [shape: f32[16,8,32], index: 1, kind: input, shape index: {}]
  %s2 = inlined_call_operand.vmem [shape: f32[16,8], index: 2, kind: input, shape index: {}]
  %s3 = inlined_call_operand.vmem [shape: f32[64,32], index: 3, kind: input, shape index: {}]
  %s4 = inlined_call_operand.vmem [shape: f32[1,32], index: 4, kind: input, shape index: {}]
  %s5 = inlined_call_operand.hbm [shape: f32[16,32], index: 5, kind: output, shape index: {0}]
  %s6 = inlined_call_operand.vmem [shape: f32[16,8], index: 6, kind: output, shape index: {1}]
  %s7 = inlined_call_operand.hbm [shape: f32[16,32], index: 7, kind: output, shape index: {2}]
  %8 = xla_tuple %s5, %s6, %s7
  %s9 = sld [smem:[#allocation0]]
  $region73: #{_attention_pallas.1} parent=0
    _
  %s11 = ssub.s32 1, %s9
  %s12 = scalar_select 0, %s11, %s9
  $region1: #{_attention_pallas.1} parent=0
    #allocation2 [shape = 'u8[65536]{0}', space=vmem, size = 0x10000, scoped, tag = 'input window, operand 1']
    #allocation3 [shape = 's32[2]{0}', space=sflag, size = 0x8, scoped, tag = 'scoped memory for _attention_pallas.1']
    #allocation4 [shape = 's32[2]{0}', space=sflag, size = 0x8, scoped, tag = 'scoped memory for _attention_pallas.1']
    #allocation5 [shape = 'u8[8192]{0}', space=vmem, size = 0x2000, scoped, tag = 'output window, operand 0']
    #allocation6 [shape = 'u8[8192]{0}', space=vmem, size = 0x2000, scoped, tag = 'output window, operand 2']
    #allocation7 [shape = 's32[2]{0}', space=sflag, size = 0x8, scoped, tag = 'scoped memory for _attention_pallas.1']
    %13 = vsyncpa [#allocation3], 0
    %s14 = scalar_lea.sflag [#allocation3], 1
    %15 = vsyncpa %s14, 0
    %16 = vsyncpa [#allocation4], 0
    %s17 = scalar_lea.sflag [#allocation4], 1
    %18 = vsyncpa %s17, 0
    %19 = vsyncpa [#allocation7], 0
    %s20 = scalar_lea.sflag [#allocation7], 1
    %21 = vsyncpa %s20, 0
    loop: start=0, step=1, limit=4
    $region2: #{_attention_pallas.1} parent=1 // loop_pre_header
      _
    $region3: #{_attention_pallas.1} parent=1 // loop_header
      %s23 = sphi 0, %s27
      %p24 = scmp.ge.s32.totalorder %s23, 4
      %s33 = sphi 0, %s35
      %s36 = sphi 0, %s33
      %s37 = sphi 0, %s36
      %s53 = sphi 0, %s37
      %s59 = sphi 0, %s61
      %s62 = sphi 0, %s59
      %s63 = sphi 0, %s62
      %s79 = sphi 0, %s63
      %s85 = sphi 0, %s87
      %s88 = sphi 0, %s85
      %s89 = sphi 0, %s88
      %s105 = sphi 0, %s89
      %s109 = sphi 0, %s109
      %s111 = sphi 0, %s109
      %s112 = sphi 0, %s111
      %s126 = sphi 0, %s112
      %s130 = sphi 0, %s130
      %s132 = sphi 0, %s130
      %s133 = sphi 0, %s132
      %s147 = sphi 0, %s133
      %s153 = sphi 0, %s155
      %s156 = sphi 0, %s153
      %s157 = sphi 0, %s156
      %s173 = sphi 0, %s157
      %s179 = sphi 0, %s181
      %s182 = sphi 0, %s179
      %s183 = sphi 0, %s182
      %s199 = sphi 0, %s183
      %s205 = sphi 0, %s207
      %s208 = sphi 0, %s205
      %s209 = sphi 0, %s208
      %s225 = sphi 0, %s209
    $region4: #{_attention_pallas.1} parent=1 // loop_header_branch
      %26 = sbr.rel (%p24) target = $region8
    $region5: #{_attention_pallas.1} parent=1 // loop_body
      %s28 = ssub.s32 %s23, 1
      %s29 = ssub.s32 %s23, 2
      %s30 = sadd.s32 %s23, 1
      %s31 = ssub.s32 %s23, %s30
      %p32 = scmp.eq.s32.totalorder %s31, 0
      %s34 = sadd.s32 %s33, 1
      %s35 = scalar_select %p32, %s33, %s34
      %p38 = pneg %p32
      %p39 = scmp.eq.s32.totalorder %s23, 1
      %p40 = por %p38, %p39
      %p41 = scmp.ne.s32.totalorder %s33, %s36
      %p42 = scmp.eq.s32.totalorder %s23, 0
      %p43 = por %p41, %p42
      %p44 = scmp.ne.s32.totalorder %s33, %s36
      %p45 = scmp.eq.s32.totalorder %s28, 1
      %p46 = por %p44, %p45
      %p47 = scmp.ne.s32.totalorder %s36, %s37
      %p48 = scmp.eq.s32.totalorder %s28, 0
      %p49 = por %p47, %p48
      %p50 = scmp.ne.s32.totalorder %s36, %s37
      %p51 = scmp.eq.s32.totalorder %s29, 1
      %p52 = por %p50, %p51
      %p54 = scmp.ne.s32.totalorder %s37, %s53
      %p55 = scmp.eq.s32.totalorder %s29, 0
      %p56 = por %p54, %p55
      %s57 = ssub.s32 %s23, %s30
      %p58 = scmp.eq.s32.totalorder %s57, 0
      %s60 = sadd.s32 %s59, 1
      %s61 = scalar_select %p58, %s59, %s60
      %p64 = pneg %p58
      %p65 = scmp.eq.s32.totalorder %s23, 1
      %p66 = por %p64, %p65
      %p67 = scmp.ne.s32.totalorder %s59, %s62
      %p68 = scmp.eq.s32.totalorder %s23, 0
      %p69 = por %p67, %p68
      %p70 = scmp.ne.s32.totalorder %s59, %s62
      %p71 = scmp.eq.s32.totalorder %s28, 1
      %p72 = por %p70, %p71
      %p73 = scmp.ne.s32.totalorder %s62, %s63
      %p74 = scmp.eq.s32.totalorder %s28, 0
      %p75 = por %p73, %p74
      %p76 = scmp.ne.s32.totalorder %s62, %s63
      %p77 = scmp.eq.s32.totalorder %s29, 1
      %p78 = por %p76, %p77
      %p80 = scmp.ne.s32.totalorder %s63, %s79
      %p81 = scmp.eq.s32.totalorder %s29, 0
      %p82 = por %p80, %p81
      %s83 = ssub.s32 %s23, %s30
      %p84 = scmp.eq.s32.totalorder %s83, 0
      %s86 = sadd.s32 %s85, 1
      %s87 = scalar_select %p84, %s85, %s86
      %p90 = pneg %p84
      %p91 = scmp.eq.s32.totalorder %s23, 1
      %p92 = por %p90, %p91
      %p93 = scmp.ne.s32.totalorder %s85, %s88
      %p94 = scmp.eq.s32.totalorder %s23, 0
      %p95 = por %p93, %p94
      %p96 = scmp.ne.s32.totalorder %s85, %s88
      %p97 = scmp.eq.s32.totalorder %s28, 1
      %p98 = por %p96, %p97
      %p99 = scmp.ne.s32.totalorder %s88, %s89
      %p100 = scmp.eq.s32.totalorder %s28, 0
      %p101 = por %p99, %p100
      %p102 = scmp.ne.s32.totalorder %s88, %s89
      %p103 = scmp.eq.s32.totalorder %s29, 1
      %p104 = por %p102, %p103
      %p106 = scmp.ne.s32.totalorder %s89, %s105
      %p107 = scmp.eq.s32.totalorder %s29, 0
      %p108 = por %p106, %p107
      %s110 = sadd.s32 %s109, 1
      %p113 = scmp.eq.s32.totalorder %s23, 1
      %p114 = scmp.ne.s32.totalorder %s109, %s111
      %p115 = scmp.eq.s32.totalorder %s23, 0
      %p116 = por %p114, %p115
      %p117 = scmp.ne.s32.totalorder %s109, %s111
      %p118 = scmp.eq.s32.totalorder %s28, 1
      %p119 = por %p117, %p118
      %p120 = scmp.ne.s32.totalorder %s111, %s112
      %p121 = scmp.eq.s32.totalorder %s28, 0
      %p122 = por %p120, %p121
      %p123 = scmp.ne.s32.totalorder %s111, %s112
      %p124 = scmp.eq.s32.totalorder %s29, 1
      %p125 = por %p123, %p124
      %p127 = scmp.ne.s32.totalorder %s112, %s126
      %p128 = scmp.eq.s32.totalorder %s29, 0
      %p129 = por %p127, %p128
      %s131 = sadd.s32 %s130, 1
      %p134 = scmp.eq.s32.totalorder %s23, 1
      %p135 = scmp.ne.s32.totalorder %s130, %s132
      %p136 = scmp.eq.s32.totalorder %s23, 0
      %p137 = por %p135, %p136
      %p138 = scmp.ne.s32.totalorder %s130, %s132
      %p139 = scmp.eq.s32.totalorder %s28, 1
      %p140 = por %p138, %p139
      %p141 = scmp.ne.s32.totalorder %s132, %s133
      %p142 = scmp.eq.s32.totalorder %s28, 0
      %p143 = por %p141, %p142
      %p144 = scmp.ne.s32.totalorder %s132, %s133
      %p145 = scmp.eq.s32.totalorder %s29, 1
      %p146 = por %p144, %p145
      %p148 = scmp.ne.s32.totalorder %s133, %s147
      %p149 = scmp.eq.s32.totalorder %s29, 0
      %p150 = por %p148, %p149
      %s151 = ssub.s32 %s23, %s30
      %p152 = scmp.eq.s32.totalorder %s151, 0
      %s154 = sadd.s32 %s153, 1
      %s155 = scalar_select %p152, %s153, %s154
      %p158 = pneg %p152
      %p159 = scmp.eq.s32.totalorder %s23, 1
      %p160 = por %p158, %p159
      %p161 = scmp.ne.s32.totalorder %s153, %s156
      %p162 = scmp.eq.s32.totalorder %s23, 0
      %p163 = por %p161, %p162
      %p164 = scmp.ne.s32.totalorder %s153, %s156
      %p165 = scmp.eq.s32.totalorder %s28, 1
      %p166 = por %p164, %p165
      %p167 = scmp.ne.s32.totalorder %s156, %s157
      %p168 = scmp.eq.s32.totalorder %s28, 0
      %p169 = por %p167, %p168
      %p170 = scmp.ne.s32.totalorder %s156, %s157
      %p171 = scmp.eq.s32.totalorder %s29, 1
      %p172 = por %p170, %p171
      %p174 = scmp.ne.s32.totalorder %s157, %s173
      %p175 = scmp.eq.s32.totalorder %s29, 0
      %p176 = por %p174, %p175
      %s177 = ssub.s32 %s23, %s30
      %p178 = scmp.eq.s32.totalorder %s177, 0
      %s180 = sadd.s32 %s179, 1
      %s181 = scalar_select %p178, %s179, %s180
      %p184 = pneg %p178
      %p185 = scmp.eq.s32.totalorder %s23, 1
      %p186 = por %p184, %p185
      %p187 = scmp.ne.s32.totalorder %s179, %s182
      %p188 = scmp.eq.s32.totalorder %s23, 0
      %p189 = por %p187, %p188
      %p190 = scmp.ne.s32.totalorder %s179, %s182
      %p191 = scmp.eq.s32.totalorder %s28, 1
      %p192 = por %p190, %p191
      %p193 = scmp.ne.s32.totalorder %s182, %s183
      %p194 = scmp.eq.s32.totalorder %s28, 0
      %p195 = por %p193, %p194
      %p196 = scmp.ne.s32.totalorder %s182, %s183
      %p197 = scmp.eq.s32.totalorder %s29, 1
      %p198 = por %p196, %p197
      %p200 = scmp.ne.s32.totalorder %s183, %s199
      %p201 = scmp.eq.s32.totalorder %s29, 0
      %p202 = por %p200, %p201
      %s203 = ssub.s32 %s23, %s30
      %p204 = scmp.eq.s32.totalorder %s203, 0
      %s206 = sadd.s32 %s205, 1
      %s207 = scalar_select %p204, %s205, %s206
      %p210 = pneg %p204
      %p211 = scmp.eq.s32.totalorder %s23, 1
      %p212 = por %p210, %p211
      %p213 = scmp.ne.s32.totalorder %s205, %s208
      %p214 = scmp.eq.s32.totalorder %s23, 0
      %p215 = por %p213, %p214
      %p216 = scmp.ne.s32.totalorder %s205, %s208
      %p217 = scmp.eq.s32.totalorder %s28, 1
      %p218 = por %p216, %p217
      %p219 = scmp.ne.s32.totalorder %s208, %s209
      %p220 = scmp.eq.s32.totalorder %s28, 0
      %p221 = por %p219, %p220
      %p222 = scmp.ne.s32.totalorder %s208, %s209
      %p223 = scmp.eq.s32.totalorder %s29, 1
      %p224 = por %p222, %p223
      %p226 = scmp.ne.s32.totalorder %s209, %s225
      %p227 = scmp.eq.s32.totalorder %s29, 0
      %p228 = por %p226, %p227
      %p229 = scmp.le.s32.totalorder 1, %s23
      %p230 = scmp.lt.s32.totalorder %s23, 3
      %p231 = pnand %p229, %p230
      %p232 = pneg %p231
      // Predicated region
      $region9: #{_attention_pallas.1} parent=5 // pred_check
        _
      $region10: #{_attention_pallas.1} parent=5 // pred_check_branch
        %234 = sbr.rel (%p231) target = $region12
      $region11: #{_attention_pallas.1} parent=5 // pred_region
        %s235 = ssub.s32 %s23, 1
        // Predicated region
        $region13: #{_attention_pallas.1} parent=11 // pred_check
          %p236 = pneg %p122
        $region14: #{_attention_pallas.1} parent=11 // pred_check_branch
          %238 = sbr.rel (%p236) target = $region16
        $region15: #{_attention_pallas.1} parent=11 // pred_region
          _
        $region16: #{_attention_pallas.1} parent=11 // pred_fallthru
          _
        // Predicated region
        $region17: #{_attention_pallas.1} parent=11 // pred_check
          %p239 = pneg %p143
        $region18: #{_attention_pallas.1} parent=11 // pred_check_branch
          %241 = sbr.rel (%p239) target = $region20
        $region19: #{_attention_pallas.1} parent=11 // pred_region
          _
        $region20: #{_attention_pallas.1} parent=11 // pred_fallthru
          _
      $region12: #{_attention_pallas.1} parent=5 // pred_fallthru
        _
      %p242 = scmp.lt.s32.totalorder %s23, 2
      // Predicated region
      $region21: #{_attention_pallas.1} parent=5 // pred_check
        %p243 = pneg %p242
      $region22: #{_attention_pallas.1} parent=5 // pred_check_branch
        %245 = sbr.rel (%p243) target = $region24
      $region23: #{_attention_pallas.1} parent=5 // pred_region
        // Predicated region
        $region25: #{_attention_pallas.1} parent=23 // pred_check
          %p246 = pneg %p43
        $region26: #{_attention_pallas.1} parent=23 // pred_check_branch
          %248 = sbr.rel (%p246) target = $region28
        $region27: #{_attention_pallas.1} parent=23 // pred_region
          %p249 = scmp.lt.s32.totalorder %s23, 1
          %s250 = scalar_select %p249, %s23, 1
          %s251 = smul.addr %s250, 8
          %s252 = scalar_lea.vmem %s0, %s251
        $region28: #{_attention_pallas.1} parent=23 // pred_fallthru
          _
        // Predicated region
        $region29: #{_attention_pallas.1} parent=23 // pred_check
          %p253 = pneg %p69
        $region30: #{_attention_pallas.1} parent=23 // pred_check_branch
          %255 = sbr.rel (%p253) target = $region32
        $region31: #{_attention_pallas.1} parent=23 // pred_region
          %s256 = sand.u32 %s59, 1
          %s257 = scalar_lea.sflag [#allocation3], %s256
          %s258 = sand.u32 %s59, 1
          %s259 = smul.addr %s258, 64
          %s260 = scalar_lea.vmem [#allocation2], %s259
          %s261 = smul.u32 8, %s23
          %263 = vsyncadd %s257, 0
          %s264 = smul.addr %s261, 8
          %s265 = scalar_lea.hbm %s1, %s264
          %s266 = sshll.u32 %s265, 4
          %s267 = int_to_ptr.hbm [resolvable:$true] %s266
          %s268 = sshll.u32 %s260, 4
          %s269 = int_to_ptr.vmem [resolvable:$true] %s268
          %274 = dma.hbm_to_vmem [thread:$0]  %s267, 1024, %s269, %s257, 128, 128, 8
        $region32: #{_attention_pallas.1} parent=23 // pred_fallthru
          _
        // Predicated region
        $region33: #{_attention_pallas.1} parent=23 // pred_check
          %p275 = pneg %p95
        $region34: #{_attention_pallas.1} parent=23 // pred_check_branch
          %277 = sbr.rel (%p275) target = $region36
        $region35: #{_attention_pallas.1} parent=23 // pred_region
          %p278 = scmp.lt.s32.totalorder %s23, 1
          %s279 = scalar_select %p278, %s23, 1
          %s280 = smul.addr %s279, 8
          %s281 = scalar_lea.vmem %s2, %s280
        $region36: #{_attention_pallas.1} parent=23 // pred_fallthru
          _
      $region24: #{_attention_pallas.1} parent=5 // pred_fallthru
        _
      %p282 = scmp.le.s32.totalorder 1, %s23
      %p283 = scmp.lt.s32.totalorder %s23, 3
      %p284 = pnand %p282, %p283
      %p285 = pneg %p284
      // Predicated region
      $region37: #{_attention_pallas.1} parent=5 // pred_check
        _
      $region38: #{_attention_pallas.1} parent=5 // pred_check_branch
        %287 = sbr.rel (%p284) target = $region40
      $region39: #{_attention_pallas.1} parent=5 // pred_region
        %s288 = ssub.s32 %s23, 1
        %s289 = sand.u32 %s62, 1
        %s290 = scalar_lea.sflag [#allocation3], %s289
        %s291 = sand.u32 %s62, 1
        %s292 = smul.addr %s291, 64
        %s293 = scalar_lea.vmem [#allocation2], %s292
        // Predicated region
        $region41: #{_attention_pallas.1} parent=39 // pred_check
          %p294 = pneg %p75
        $region42: #{_attention_pallas.1} parent=39 // pred_check_branch
          %296 = sbr.rel (%p294) target = $region44
        $region43: #{_attention_pallas.1} parent=39 // pred_region
          %298 = dma.done %s290, 1024
        $region44: #{_attention_pallas.1} parent=39 // pred_fallthru
          _
        %p299 = scmp.lt.s32.totalorder %s28, 1
        %s300 = scalar_select %p299, %s28, 1
        %s301 = smul.addr %s300, 8
        %s302 = scalar_lea.vmem %s0, %s301
        %p303 = pneg %p49
        %p304 = pneg %p46
        %s305 = sand.u32 %s62, 1
        %s306 = scalar_lea.sflag [#allocation3], %s305
        %s307 = sand.u32 %s62, 1
        %s308 = smul.addr %s307, 64
        %s309 = scalar_lea.vmem [#allocation2], %s308
        %p310 = pneg %p75
        %p311 = pneg %p72
        %p312 = scmp.lt.s32.totalorder %s28, 1
        %s313 = scalar_select %p312, %s28, 1
        %s314 = smul.addr %s313, 8
        %s315 = scalar_lea.vmem %s2, %s314
        %p316 = pneg %p101
        %p317 = pneg %p98
        %p318 = pneg %p122
        %p319 = pneg %p119
        %p320 = pneg %p143
        %p321 = pneg %p140
        %p322 = pneg %p169
        %p323 = pneg %p166
        %s324 = sand.u32 %s156, 1
        %s325 = scalar_lea.sflag [#allocation4], %s324
        %s326 = sand.u32 %s156, 1
        %s327 = smul.addr %s326, 8
        %s328 = scalar_lea.vmem [#allocation5], %s327
        %p329 = pneg %p195
        %p330 = pneg %p192
        %p331 = scmp.lt.s32.totalorder %s28, 1
        %s332 = scalar_select %p331, %s28, 1
        %s333 = smul.addr %s332, 8
        %s334 = scalar_lea.vmem %s6, %s333
        %p335 = pneg %p221
        %p336 = pneg %p218
        %s337 = sand.u32 %s208, 1
        %s338 = scalar_lea.sflag [#allocation7], %s337
        %s339 = sand.u32 %s208, 1
        %s340 = smul.addr %s339, 8
        %s341 = scalar_lea.vmem [#allocation6], %s340
        %p342 = scmp.lt.s32.totalorder %s28, 1
        %s343 = scalar_select %p342, %s28, 1
        %s344 = smul.addr %s343, 8
        %s345 = scalar_lea.vmem %s0, %s344
        %s346 = smul.u32 8, %s28
        %p347 = scmp.lt.s32.totalorder %s28, 1
        %s348 = scalar_select %p347, %s28, 1
        %s349 = smul.addr %s348, 8
        %s350 = scalar_lea.vmem %s2, %s349
        %p351 = scmp.lt.s32.totalorder %s28, 1
        %s352 = scalar_select %p351, %s28, 1
        %s353 = smul.addr %s352, 8
        %s354 = scalar_lea.vmem %s6, %s353
        %v355 = vld [vmem:[%s345] sm:$0xff]
        %v356 = vld [vmem:[%s293] sm:$0xff]
        %v357 = vld [vmem:[%s293 + $0x8] sm:$0xff]
        %v358 = vld [vmem:[%s293 + $0x10] sm:$0xff]
        %v359 = vld [vmem:[%s293 + $0x18] sm:$0xff]
        %v360 = vld [vmem:[%s293 + $0x20] sm:$0xff]
        %v361 = vld [vmem:[%s293 + $0x28] sm:$0xff]
        %v362 = vld [vmem:[%s293 + $0x30] sm:$0xff]
        %v363 = vld [vmem:[%s293 + $0x38] sm:$0xff]
        %v365 = vrot.slane %v355, 1
        %v366 = vrot.slane %v355, 2
        %v367 = vrot.slane %v355, 3
        %v368 = vrot.slane %v355, 4
        %v369 = vrot.slane %v355, 5
        %v370 = vrot.slane %v355, 6
        %v371 = vrot.slane %v355, 7
        %v372 = vperm.slane %v355, 0
        %v373 = vperm.slane %v365, 0
        %v374 = vperm.slane %v366, 0
        %v375 = vperm.slane %v367, 0
        %v376 = vperm.slane %v368, 0
        %v377 = vperm.slane %v369, 0
        %v378 = vperm.slane %v370, 0
        %v379 = vperm.slane %v371, 0
        %v388 = vmul.f32 %v372, %v356
        %v389 = vmul.f32 %v373, %v357
        %v390 = vmul.f32 %v374, %v358
        %v391 = vmul.f32 %v375, %v359
        %v392 = vmul.f32 %v376, %v360
        %v393 = vmul.f32 %v377, %v361
        %v394 = vmul.f32 %v378, %v362
        %v395 = vmul.f32 %v379, %v363
        %vm396 = vcmask 261120
        %v397 = vsel %vm396, %v388, 0.0
        %398 = vadd.xlane.f32.xlu0 %v397
        %v399 = vpop.xlane.xlu0 %398
        %v400 = vsel %vm396, %v389, 0.0
        %401 = vadd.xlane.f32.xlu0 %v400
        %v402 = vpop.xlane.xlu0 %401
        %v403 = vsel %vm396, %v390, 0.0
        %404 = vadd.xlane.f32.xlu0 %v403
        %v405 = vpop.xlane.xlu0 %404
        %v406 = vsel %vm396, %v391, 0.0
        %407 = vadd.xlane.f32.xlu0 %v406
        %v408 = vpop.xlane.xlu0 %407
        %v409 = vsel %vm396, %v392, 0.0
        %410 = vadd.xlane.f32.xlu0 %v409
        %v411 = vpop.xlane.xlu0 %410
        %v412 = vsel %vm396, %v393, 0.0
        %413 = vadd.xlane.f32.xlu0 %v412
        %v414 = vpop.xlane.xlu0 %413
        %v415 = vsel %vm396, %v394, 0.0
        %416 = vadd.xlane.f32.xlu0 %v415
        %v417 = vpop.xlane.xlu0 %416
        %v418 = vsel %vm396, %v395, 0.0
        %419 = vadd.xlane.f32.xlu0 %v418
        %v420 = vpop.xlane.xlu0 %419
        %v421 = vld [vmem:[%s350] sm:$0xff]
        %v423 = vperm.slane %v421, 0
        %v424 = vlaneseq
        %v425 = vshrl.u32 %v424, 7
        %427 = vset.pattern.permute.xlu0 %v425
        %428 = vperm.xlu0 %427, %v423
        %v429 = vpop.permute.xlu0 %428
        %v430 = vperm.slane %v421, 1
        %v431 = vlaneseq
        %v432 = vshrl.u32 %v431, 7
        %434 = vset.pattern.permute.xlu0 %v432
        %435 = vperm.xlu0 %434, %v430
        %v436 = vpop.permute.xlu0 %435
        %v437 = vperm.slane %v421, 2
        %v438 = vlaneseq
        %v439 = vshrl.u32 %v438, 7
        %441 = vset.pattern.permute.xlu0 %v439
        %442 = vperm.xlu0 %441, %v437
        %v443 = vpop.permute.xlu0 %442
        %v444 = vperm.slane %v421, 3
        %v445 = vlaneseq
        %v446 = vshrl.u32 %v445, 7
        %448 = vset.pattern.permute.xlu0 %v446
        %449 = vperm.xlu0 %448, %v444
        %v450 = vpop.permute.xlu0 %449
        %v451 = vperm.slane %v421, 4
        %v452 = vlaneseq
        %v453 = vshrl.u32 %v452, 7
        %455 = vset.pattern.permute.xlu0 %v453
        %456 = vperm.xlu0 %455, %v451
        %v457 = vpop.permute.xlu0 %456
        %v458 = vperm.slane %v421, 5
        %v459 = vlaneseq
        %v460 = vshrl.u32 %v459, 7
        %462 = vset.pattern.permute.xlu0 %v460
        %463 = vperm.xlu0 %462, %v458
        %v464 = vpop.permute.xlu0 %463
        %v465 = vperm.slane %v421, 6
        %v466 = vlaneseq
        %v467 = vshrl.u32 %v466, 7
        %469 = vset.pattern.permute.xlu0 %v467
        %470 = vperm.xlu0 %469, %v465
        %v471 = vpop.permute.xlu0 %470
        %v472 = vperm.slane %v421, 7
        %v473 = vlaneseq
        %v474 = vshrl.u32 %v473, 7
        %476 = vset.pattern.permute.xlu0 %v474
        %477 = vperm.xlu0 %476, %v472
        %v478 = vpop.permute.xlu0 %477
        %v487 = vadd.f32 %v399, %v429
        %v488 = vadd.f32 %v402, %v436
        %v489 = vadd.f32 %v405, %v443
        %v490 = vadd.f32 %v408, %v450
        %v491 = vadd.f32 %v411, %v457
        %v492 = vadd.f32 %v414, %v464
        %v493 = vadd.f32 %v417, %v471
        %v494 = vadd.f32 %v420, %v478
        %503 = vset.pattern.permute.xlu0 0
        %504 = vperm.xlu0 %503, %v487
        %v505 = vpop.permute.xlu0 %504
        %506 = vset.pattern.permute.xlu0 0
        %507 = vperm.xlu0 %506, %v488
        %v508 = vpop.permute.xlu0 %507
        %509 = vset.pattern.permute.xlu0 0
        %510 = vperm.xlu0 %509, %v489
        %v511 = vpop.permute.xlu0 %510
        %512 = vset.pattern.permute.xlu0 0
        %513 = vperm.xlu0 %512, %v490
        %v514 = vpop.permute.xlu0 %513
        %515 = vset.pattern.permute.xlu0 0
        %516 = vperm.xlu0 %515, %v491
        %v517 = vpop.permute.xlu0 %516
        %518 = vset.pattern.permute.xlu0 0
        %519 = vperm.xlu0 %518, %v492
        %v520 = vpop.permute.xlu0 %519
        %521 = vset.pattern.permute.xlu0 0
        %522 = vperm.xlu0 %521, %v493
        %v523 = vpop.permute.xlu0 %522
        %524 = vset.pattern.permute.xlu0 0
        %525 = vperm.xlu0 %524, %v494
        %v526 = vpop.permute.xlu0 %525
        %v527 = vlaneseq
        %v528 = vand.u32 %v527, 127
        %v529 = vperm.slane %v505, %v528
        %v530 = vperm.slane %v508, %v528
        %v531 = vperm.slane %v511, %v528
        %v532 = vperm.slane %v514, %v528
        %v533 = vperm.slane %v517, %v528
        %v534 = vperm.slane %v520, %v528
        %v535 = vperm.slane %v523, %v528
        %v536 = vperm.slane %v526, %v528
        %vm537 = vcmask 1041409
        %v538 = vsel %vm537, %v530, %v529
        %vm539 = vcmask 1042434
        %v540 = vsel %vm539, %v531, %v538
        %vm541 = vcmask 1043459
        %v542 = vsel %vm541, %v532, %v540
        %vm543 = vcmask 1044484
        %v544 = vsel %vm543, %v533, %v542
        %vm545 = vcmask 1045509
        %v546 = vsel %vm545, %v534, %v544
        %vm547 = vcmask 1046534
        %v548 = vsel %vm547, %v535, %v546
        %vm549 = vcmask 1047559
        %v550 = vsel %vm549, %v536, %v548
        %vm552 = vcmask 64512
        %v553 = vsel %vm552, %v550, -inf
        %554 = vmax.xlane.f32.xlu0 %v553
        %v555 = vpop.xlane.xlu0 %554
        %v557 = vperm.slane %v555, 0
        %v558 = vperm.slane %v555, 1
        %v559 = vperm.slane %v555, 2
        %v560 = vperm.slane %v555, 3
        %v561 = vperm.slane %v555, 4
        %v562 = vperm.slane %v555, 5
        %v563 = vperm.slane %v555, 6
        %v564 = vperm.slane %v555, 7
        %v573 = vsub.f32 %v487, %v557
        %v574 = vsub.f32 %v488, %v558
        %v575 = vsub.f32 %v489, %v559
        %v576 = vsub.f32 %v490, %v560
        %v577 = vsub.f32 %v491, %v561
        %v578 = vsub.f32 %v492, %v562
        %v579 = vsub.f32 %v493, %v563
        %v580 = vsub.f32 %v494, %v564
        %v581 = vmul.f32 %v573, 1.442695
        %v582 = vpow.pop %v581
        %v583 = vmul.f32 %v574, 1.442695
        %v584 = vpow.pop %v583
        %v585 = vmul.f32 %v575, 1.442695
        %v586 = vpow.pop %v585
        %v587 = vmul.f32 %v576, 1.442695
        %v588 = vpow.pop %v587
        %v589 = vmul.f32 %v577, 1.442695
        %v590 = vpow.pop %v589
        %v591 = vmul.f32 %v578, 1.442695
        %v592 = vpow.pop %v591
        %v593 = vmul.f32 %v579, 1.442695
        %v594 = vpow.pop %v593
        %v595 = vmul.f32 %v580, 1.442695
        %v596 = vpow.pop %v595
        %605 = vset.pattern.permute.xlu0 0
        %606 = vperm.xlu0 %605, %v582
        %v607 = vpop.permute.xlu0 %606
        %608 = vset.pattern.permute.xlu0 0
        %609 = vperm.xlu0 %608, %v584
        %v610 = vpop.permute.xlu0 %609
        %611 = vset.pattern.permute.xlu0 0
        %612 = vperm.xlu0 %611, %v586
        %v613 = vpop.permute.xlu0 %612
        %614 = vset.pattern.permute.xlu0 0
        %615 = vperm.xlu0 %614, %v588
        %v616 = vpop.permute.xlu0 %615
        %617 = vset.pattern.permute.xlu0 0
        %618 = vperm.xlu0 %617, %v590
        %v619 = vpop.permute.xlu0 %618
        %620 = vset.pattern.permute.xlu0 0
        %621 = vperm.xlu0 %620, %v592
        %v622 = vpop.permute.xlu0 %621
        %623 = vset.pattern.permute.xlu0 0
        %624 = vperm.xlu0 %623, %v594
        %v625 = vpop.permute.xlu0 %624
        %626 = vset.pattern.permute.xlu0 0
        %627 = vperm.xlu0 %626, %v596
        %v628 = vpop.permute.xlu0 %627
        %v629 = vperm.slane %v607, %v528
        %v630 = vperm.slane %v610, %v528
        %v631 = vperm.slane %v613, %v528
        %v632 = vperm.slane %v616, %v528
        %v633 = vperm.slane %v619, %v528
        %v634 = vperm.slane %v622, %v528
        %v635 = vperm.slane %v625, %v528
        %v636 = vperm.slane %v628, %v528
        %v637 = vsel %vm537, %v630, %v629
        %v638 = vsel %vm539, %v631, %v637
        %v639 = vsel %vm541, %v632, %v638
        %v640 = vsel %vm543, %v633, %v639
        %v641 = vsel %vm545, %v634, %v640
        %v642 = vsel %vm547, %v635, %v641
        %v643 = vsel %vm549, %v636, %v642
        %v645 = vsel %vm552, %v643, 0.0
        %646 = vadd.xlane.f32.xlu0 %v645
        %v647 = vpop.xlane.xlu0 %646
        %v649 = vperm.slane %v647, 0
        %v650 = vperm.slane %v647, 1
        %v651 = vperm.slane %v647, 2
        %v652 = vperm.slane %v647, 3
        %v653 = vperm.slane %v647, 4
        %v654 = vperm.slane %v647, 5
        %v655 = vperm.slane %v647, 6
        %v656 = vperm.slane %v647, 7
        %v665 = vrcp.pop %v649
        %v666 = vmul.f32 %v649, %v665
        %v667 = vsub.f32 1.0, %v666
        %v668 = vmul.f32 %v665, %v667
        %v669 = vadd.f32 %v665, %v668
        %vm670 = vweird.f32 %v649
        %vm671 = vweird.f32 %v665
        %vm672 = vmor %vm670, %vm671
        %v673 = vsel %vm672, %v665, %v669
        %v674 = vand.u32 2147483647, %v649
        %vm675 = vcmp.eq.f32.partialorder %v674, 8.507059e+37
        %v676 = vand.u32 %v649, 2147483648
        %v677 = vor.u32 1.1754944e-38, %v676
        %v678 = vsel %vm675, %v677, %v673
        %v679 = vmul.f32 %v582, %v678
        %v680 = vrcp.pop %v650
        %v681 = vmul.f32 %v650, %v680
        %v682 = vsub.f32 1.0, %v681
        %v683 = vmul.f32 %v680, %v682
        %v684 = vadd.f32 %v680, %v683
        %vm685 = vweird.f32 %v650
        %vm686 = vweird.f32 %v680
        %vm687 = vmor %vm685, %vm686
        %v688 = vsel %vm687, %v680, %v684
        %v689 = vand.u32 2147483647, %v650
        %vm690 = vcmp.eq.f32.partialorder %v689, 8.507059e+37
        %v691 = vand.u32 %v650, 2147483648
        %v692 = vor.u32 1.1754944e-38, %v691
        %v693 = vsel %vm690, %v692, %v688
        %v694 = vmul.f32 %v584, %v693
        %v695 = vrcp.pop %v651
        %v696 = vmul.f32 %v651, %v695
        %v697 = vsub.f32 1.0, %v696
        %v698 = vmul.f32 %v695, %v697
        %v699 = vadd.f32 %v695, %v698
        %vm700 = vweird.f32 %v651
        %vm701 = vweird.f32 %v695
        %vm702 = vmor %vm700, %vm701
        %v703 = vsel %vm702, %v695, %v699
        %v704 = vand.u32 2147483647, %v651
        %vm705 = vcmp.eq.f32.partialorder %v704, 8.507059e+37
        %v706 = vand.u32 %v651, 2147483648
        %v707 = vor.u32 1.1754944e-38, %v706
        %v708 = vsel %vm705, %v707, %v703
        %v709 = vmul.f32 %v586, %v708
        %v710 = vrcp.pop %v652
        %v711 = vmul.f32 %v652, %v710
        %v712 = vsub.f32 1.0, %v711
        %v713 = vmul.f32 %v710, %v712
        %v714 = vadd.f32 %v710, %v713
        %vm715 = vweird.f32 %v652
        %vm716 = vweird.f32 %v710
        %vm717 = vmor %vm715, %vm716
        %v718 = vsel %vm717, %v710, %v714
        %v719 = vand.u32 2147483647, %v652
        %vm720 = vcmp.eq.f32.partialorder %v719, 8.507059e+37
        %v721 = vand.u32 %v652, 2147483648
        %v722 = vor.u32 1.1754944e-38, %v721
        %v723 = vsel %vm720, %v722, %v718
        %v724 = vmul.f32 %v588, %v723
        %v725 = vrcp.pop %v653
        %v726 = vmul.f32 %v653, %v725
        %v727 = vsub.f32 1.0, %v726
        %v728 = vmul.f32 %v725, %v727
        %v729 = vadd.f32 %v725, %v728
        %vm730 = vweird.f32 %v653
        %vm731 = vweird.f32 %v725
        %vm732 = vmor %vm730, %vm731
        %v733 = vsel %vm732, %v725, %v729
        %v734 = vand.u32 2147483647, %v653
        %vm735 = vcmp.eq.f32.partialorder %v734, 8.507059e+37
        %v736 = vand.u32 %v653, 2147483648
        %v737 = vor.u32 1.1754944e-38, %v736
        %v738 = vsel %vm735, %v737, %v733
        %v739 = vmul.f32 %v590, %v738
        %v740 = vrcp.pop %v654
        %v741 = vmul.f32 %v654, %v740
        %v742 = vsub.f32 1.0, %v741
        %v743 = vmul.f32 %v740, %v742
        %v744 = vadd.f32 %v740, %v743
        %vm745 = vweird.f32 %v654
        %vm746 = vweird.f32 %v740
        %vm747 = vmor %vm745, %vm746
        %v748 = vsel %vm747, %v740, %v744
        %v749 = vand.u32 2147483647, %v654
        %vm750 = vcmp.eq.f32.partialorder %v749, 8.507059e+37
        %v751 = vand.u32 %v654, 2147483648
        %v752 = vor.u32 1.1754944e-38, %v751
        %v753 = vsel %vm750, %v752, %v748
        %v754 = vmul.f32 %v592, %v753
        %v755 = vrcp.pop %v655
        %v756 = vmul.f32 %v655, %v755
        %v757 = vsub.f32 1.0, %v756
        %v758 = vmul.f32 %v755, %v757
        %v759 = vadd.f32 %v755, %v758
        %vm760 = vweird.f32 %v655
        %vm761 = vweird.f32 %v755
        %vm762 = vmor %vm760, %vm761
        %v763 = vsel %vm762, %v755, %v759
        %v764 = vand.u32 2147483647, %v655
        %vm765 = vcmp.eq.f32.partialorder %v764, 8.507059e+37
        %v766 = vand.u32 %v655, 2147483648
        %v767 = vor.u32 1.1754944e-38, %v766
        %v768 = vsel %vm765, %v767, %v763
        %v769 = vmul.f32 %v594, %v768
        %v770 = vrcp.pop %v656
        %v771 = vmul.f32 %v656, %v770
        %v772 = vsub.f32 1.0, %v771
        %v773 = vmul.f32 %v770, %v772
        %v774 = vadd.f32 %v770, %v773
        %vm775 = vweird.f32 %v656
        %vm776 = vweird.f32 %v770
        %vm777 = vmor %vm775, %vm776
        %v778 = vsel %vm777, %v770, %v774
        %v779 = vand.u32 2147483647, %v656
        %vm780 = vcmp.eq.f32.partialorder %v779, 8.507059e+37
        %v781 = vand.u32 %v656, 2147483648
        %v782 = vor.u32 1.1754944e-38, %v781
        %v783 = vsel %vm780, %v782, %v778
        %v784 = vmul.f32 %v596, %v783
        %786 = vset.pattern.permute.xlu0 0
        %787 = vperm.xlu0 %786, %v679
        %v788 = vpop.permute.xlu0 %787
        %791 = vset.pattern.permute.xlu0 0
        %792 = vperm.xlu0 %791, %v694
        %v793 = vpop.permute.xlu0 %792
        %796 = vset.pattern.permute.xlu0 0
        %797 = vperm.xlu0 %796, %v709
        %v798 = vpop.permute.xlu0 %797
        %801 = vset.pattern.permute.xlu0 0
        %802 = vperm.xlu0 %801, %v724
        %v803 = vpop.permute.xlu0 %802
        %806 = vset.pattern.permute.xlu0 0
        %807 = vperm.xlu0 %806, %v739
        %v808 = vpop.permute.xlu0 %807
        %811 = vset.pattern.permute.xlu0 0
        %812 = vperm.xlu0 %811, %v754
        %v813 = vpop.permute.xlu0 %812
        %816 = vset.pattern.permute.xlu0 0
        %817 = vperm.xlu0 %816, %v769
        %v818 = vpop.permute.xlu0 %817
        %821 = vset.pattern.permute.xlu0 0
        %822 = vperm.xlu0 %821, %v784
        %v823 = vpop.permute.xlu0 %822
        %v825 = vmul.f32 %v788, %v356
        %v826 = vmul.f32 %v793, %v357
        %v827 = vmul.f32 %v798, %v358
        %v828 = vmul.f32 %v803, %v359
        %v829 = vmul.f32 %v808, %v360
        %v830 = vmul.f32 %v813, %v361
        %v831 = vmul.f32 %v818, %v362
        %v832 = vmul.f32 %v823, %v363
        %v833 = vsel %vm396, %v825, 0.0
        %v834 = vrot.slane %v833, 4
        %v835 = vadd.f32 %v833, %v834
        %v836 = vrot.slane %v835, 2
        %v837 = vadd.f32 %v835, %v836
        %v838 = vrot.slane %v837, 1
        %v839 = vadd.f32 %v837, %v838
        %v840 = vsel %vm396, %v826, 0.0
        %v841 = vrot.slane %v840, 4
        %v842 = vadd.f32 %v840, %v841
        %v843 = vrot.slane %v842, 2
        %v844 = vadd.f32 %v842, %v843
        %v845 = vrot.slane %v844, 1
        %v846 = vadd.f32 %v844, %v845
        %v847 = vsel %vm396, %v827, 0.0
        %v848 = vrot.slane %v847, 4
        %v849 = vadd.f32 %v847, %v848
        %v850 = vrot.slane %v849, 2
        %v851 = vadd.f32 %v849, %v850
        %v852 = vrot.slane %v851, 1
        %v853 = vadd.f32 %v851, %v852
        %v854 = vsel %vm396, %v828, 0.0
        %v855 = vrot.slane %v854, 4
        %v856 = vadd.f32 %v854, %v855
        %v857 = vrot.slane %v856, 2
        %v858 = vadd.f32 %v856, %v857
        %v859 = vrot.slane %v858, 1
        %v860 = vadd.f32 %v858, %v859
        %v861 = vsel %vm396, %v829, 0.0
        %v862 = vrot.slane %v861, 4
        %v863 = vadd.f32 %v861, %v862
        %v864 = vrot.slane %v863, 2
        %v865 = vadd.f32 %v863, %v864
        %v866 = vrot.slane %v865, 1
        %v867 = vadd.f32 %v865, %v866
        %v868 = vsel %vm396, %v830, 0.0
        %v869 = vrot.slane %v868, 4
        %v870 = vadd.f32 %v868, %v869
        %v871 = vrot.slane %v870, 2
        %v872 = vadd.f32 %v870, %v871
        %v873 = vrot.slane %v872, 1
        %v874 = vadd.f32 %v872, %v873
        %v875 = vsel %vm396, %v831, 0.0
        %v876 = vrot.slane %v875, 4
        %v877 = vadd.f32 %v875, %v876
        %v878 = vrot.slane %v877, 2
        %v879 = vadd.f32 %v877, %v878
        %v880 = vrot.slane %v879, 1
        %v881 = vadd.f32 %v879, %v880
        %v882 = vsel %vm396, %v832, 0.0
        %v883 = vrot.slane %v882, 4
        %v884 = vadd.f32 %v882, %v883
        %v885 = vrot.slane %v884, 2
        %v886 = vadd.f32 %v884, %v885
        %v887 = vrot.slane %v886, 1
        %v888 = vadd.f32 %v886, %v887
        %v889 = vld [vmem:[%s3] sm:$0xff]
        %v890 = vld [vmem:[%s3 + $0x8] sm:$0xff]
        %v891 = vld [vmem:[%s3 + $0x10] sm:$0xff]
        %v892 = vld [vmem:[%s3 + $0x18] sm:$0xff]
        %v893 = vld [vmem:[%s3 + $0x20] sm:$0xff]
        %v894 = vld [vmem:[%s3 + $0x28] sm:$0xff]
        %v895 = vld [vmem:[%s3 + $0x30] sm:$0xff]
        %v896 = vld [vmem:[%s3 + $0x38] sm:$0xff]
        %v905 = vsel %vm537, %v846, %v839
        %v906 = vsel %vm539, %v853, %v905
        %v907 = vsel %vm541, %v860, %v906
        %v908 = vsel %vm543, %v867, %v907
        %v909 = vsel %vm545, %v874, %v908
        %v910 = vsel %vm547, %v881, %v909
        %v911 = vsel %vm549, %v888, %v910
        %v912 = vsel %vm396, %v911, 0
        %914 = vmatpush.msra.mxu0 0.0
        %915 = vmatpush.msra.mxu0 0.0
        %916 = vmatpush.msra.mxu0 0.0
        %917 = vmatpush.msra.mxu0 0.0
        %918 = vmatpush.msra.mxu0 0.0
        %919 = vmatpush.msra.mxu0 0.0
        %920 = vmatpush.msra.mxu0 0.0
        %921 = vmatpush.msra.mxu0 0.0
        %922 = vmatpush.msra.mxu0 0.0
        %923 = vmatpush.msra.mxu0 0.0
        %924 = vmatpush.msra.mxu0 0.0
        %925 = vmatpush.msra.mxu0 0.0
        %926 = vmatpush.msra.mxu0 %v896
        %927 = vmatpush.msra.mxu0 %v895
        %928 = vmatpush.msra.mxu0 %v894
        %929 = vmatpush.msra.mxu0 %v893
        %930 = vmatmul.f32.gmra.mxu0 %v912
        %v931 = vpop.f32.mrf.mxu0
        %v932 = vadd.f32 0.0, %v931
        %933 = vdwg.mxu0
        %v934 = vsel %vm396, %v355, 0
        %936 = vmatpush.msra.mxu0 0.0
        %937 = vmatpush.msra.mxu0 0.0
        %938 = vmatpush.msra.mxu0 0.0
        %939 = vmatpush.msra.mxu0 0.0
        %940 = vmatpush.msra.mxu0 0.0
        %941 = vmatpush.msra.mxu0 0.0
        %942 = vmatpush.msra.mxu0 0.0
        %943 = vmatpush.msra.mxu0 0.0
        %944 = vmatpush.msra.mxu0 0.0
        %945 = vmatpush.msra.mxu0 0.0
        %946 = vmatpush.msra.mxu0 0.0
        %947 = vmatpush.msra.mxu0 0.0
        %948 = vmatpush.msra.mxu0 %v892
        %949 = vmatpush.msra.mxu0 %v891
        %950 = vmatpush.msra.mxu0 %v890
        %951 = vmatpush.msra.mxu0 %v889
        %952 = vmatmul.f32.gmra.mxu0 %v934
        %v953 = vpop.f32.mrf.mxu0
        %v954 = vadd.f32 %v932, %v953
        %955 = vdwg.mxu0
        %v956 = vld [vmem:[%s4] sm:$0x1]
        %v958 = vperm.slane %v956, 0
        %v960 = vadd.f32 %v954, %v958
        %v961 = vtanh.pop %v960
        %962 = vst.msk [vmem:[%s328] sm:$0xff] %vm396, %v961
        %v963 = vperm.slane %v788, %v528
        %v964 = vperm.slane %v793, %v528
        %v965 = vperm.slane %v798, %v528
        %v966 = vperm.slane %v803, %v528
        %v967 = vperm.slane %v808, %v528
        %v968 = vperm.slane %v813, %v528
        %v969 = vperm.slane %v818, %v528
        %v970 = vperm.slane %v823, %v528
        %v971 = vsel %vm537, %v964, %v963
        %v972 = vsel %vm539, %v965, %v971
        %v973 = vsel %vm541, %v966, %v972
        %v974 = vsel %vm543, %v967, %v973
        %v975 = vsel %vm545, %v968, %v974
        %v976 = vsel %vm547, %v969, %v975
        %v977 = vsel %vm549, %v970, %v976
        %979 = vst.msk [vmem:[%s354] sm:$0xff] %vm552, %v977
        %981 = vst.msk [vmem:[%s341] sm:$0xff] %vm396, %v911
        %s982 = sand.u32 %s156, 1
        %s983 = scalar_lea.sflag [#allocation4], %s982
        %s984 = sand.u32 %s156, 1
        %s985 = smul.addr %s984, 8
        %s986 = scalar_lea.vmem [#allocation5], %s985
        %p987 = scmp.lt.s32.totalorder %s28, 1
        %s988 = scalar_select %p987, %s28, 1
        %s989 = smul.addr %s988, 8
        %s990 = scalar_lea.vmem %s6, %s989
        %s991 = sand.u32 %s208, 1
        %s992 = scalar_lea.sflag [#allocation7], %s991
        %s993 = sand.u32 %s208, 1
        %s994 = smul.addr %s993, 8
        %s995 = scalar_lea.vmem [#allocation6], %s994
        // Predicated region
        $region45: #{_attention_pallas.1} parent=39 // pred_check
          %p996 = pneg %p166
        $region46: #{_attention_pallas.1} parent=39 // pred_check_branch
          %998 = sbr.rel (%p996) target = $region48
        $region47: #{_attention_pallas.1} parent=39 // pred_region
          %1000 = vsyncadd %s983, 0
          %s1001 = smul.addr %s28, 8
          %s1002 = scalar_lea.hbm %s5, %s1001
          %s1004 = sshll.u32 %s986, 4
          %s1005 = int_to_ptr.vmem [resolvable:$true] %s1004
          %s1006 = sshll.u32 %s1002, 4
          %s1007 = int_to_ptr.hbm [resolvable:$true] %s1006
          %1009 = dma.vmem_to_hbm [thread:$0]  %s1005, 128, %s1007, %s983
        $region48: #{_attention_pallas.1} parent=39 // pred_fallthru
          _
        // Predicated region
        $region49: #{_attention_pallas.1} parent=39 // pred_check
          %p1010 = pneg %p192
        $region50: #{_attention_pallas.1} parent=39 // pred_check_branch
          %1012 = sbr.rel (%p1010) target = $region52
        $region51: #{_attention_pallas.1} parent=39 // pred_region
          _
        $region52: #{_attention_pallas.1} parent=39 // pred_fallthru
          _
        // Predicated region
        $region53: #{_attention_pallas.1} parent=39 // pred_check
          %p1013 = pneg %p218
        $region54: #{_attention_pallas.1} parent=39 // pred_check_branch
          %1015 = sbr.rel (%p1013) target = $region56
        $region55: #{_attention_pallas.1} parent=39 // pred_region
          %1017 = vsyncadd %s992, 0
          %s1018 = smul.addr %s28, 8
          %s1019 = scalar_lea.hbm %s7, %s1018
          %s1021 = sshll.u32 %s995, 4
          %s1022 = int_to_ptr.vmem [resolvable:$true] %s1021
          %s1023 = sshll.u32 %s1019, 4
          %s1024 = int_to_ptr.hbm [resolvable:$true] %s1023
          %1026 = dma.vmem_to_hbm [thread:$0]  %s1022, 128, %s1024, %s992
        $region56: #{_attention_pallas.1} parent=39 // pred_fallthru
          _
      $region40: #{_attention_pallas.1} parent=5 // pred_fallthru
        _
      %p1027 = scmp.le.s32.totalorder 2, %s23
      // Predicated region
      $region57: #{_attention_pallas.1} parent=5 // pred_check
        %p1028 = pneg %p1027
      $region58: #{_attention_pallas.1} parent=5 // pred_check_branch
        %1030 = sbr.rel (%p1028) target = $region60
      $region59: #{_attention_pallas.1} parent=5 // pred_region
        %s1031 = ssub.s32 %s23, 2
        // Predicated region
        $region61: #{_attention_pallas.1} parent=59 // pred_check
          %p1032 = pneg %p172
        $region62: #{_attention_pallas.1} parent=59 // pred_check_branch
          %1034 = sbr.rel (%p1032) target = $region64
        $region63: #{_attention_pallas.1} parent=59 // pred_region
          %s1035 = sand.u32 %s157, 1
          %s1036 = scalar_lea.sflag [#allocation4], %s1035
          %s1037 = sand.u32 %s157, 1
          %s1038 = smul.addr %s1037, 8
          %s1039 = scalar_lea.vmem [#allocation5], %s1038
          %1041 = dma.done %s1036, 128
        $region64: #{_attention_pallas.1} parent=59 // pred_fallthru
          _
        // Predicated region
        $region65: #{_attention_pallas.1} parent=59 // pred_check
          %p1042 = pneg %p198
        $region66: #{_attention_pallas.1} parent=59 // pred_check_branch
          %1044 = sbr.rel (%p1042) target = $region68
        $region67: #{_attention_pallas.1} parent=59 // pred_region
          %p1045 = scmp.lt.s32.totalorder %s29, 1
          %s1046 = scalar_select %p1045, %s29, 1
          %s1047 = smul.addr %s1046, 8
          %s1048 = scalar_lea.vmem %s6, %s1047
        $region68: #{_attention_pallas.1} parent=59 // pred_fallthru
          _
        // Predicated region
        $region69: #{_attention_pallas.1} parent=59 // pred_check
          %p1049 = pneg %p224
        $region70: #{_attention_pallas.1} parent=59 // pred_check_branch
          %1051 = sbr.rel (%p1049) target = $region72
        $region71: #{_attention_pallas.1} parent=59 // pred_region
          %s1052 = sand.u32 %s209, 1
          %s1053 = scalar_lea.sflag [#allocation7], %s1052
          %s1054 = sand.u32 %s209, 1
          %s1055 = smul.addr %s1054, 8
          %s1056 = scalar_lea.vmem [#allocation6], %s1055
          %1058 = dma.done %s1053, 128
        $region72: #{_attention_pallas.1} parent=59 // pred_fallthru
          _
      $region60: #{_attention_pallas.1} parent=5 // pred_fallthru
        _
    $region6: #{_attention_pallas.1} parent=1 // loop_footer
      %s27 = sadd.s32 1, %s23
    $region7: #{_attention_pallas.1} parent=1 // loop_footer_branch
      %22 = sbr.rel target = $region3
    $region8: #{_attention_pallas.1} parent=1 // loop_exit
      _
    %1059 = vsyncpa [#allocation3], 1
    %s1060 = scalar_lea.sflag [#allocation3], 1
    %1061 = vsyncpa %s1060, 1
    %1062 = vsyncpa [#allocation4], 1
    %s1063 = scalar_lea.sflag [#allocation4], 1
    %1064 = vsyncpa %s1063, 1
    %1065 = vsyncpa [#allocation7], 1
    %s1066 = scalar_lea.sflag [#allocation7], 1
    %1067 = vsyncpa %s1066, 1

</llo_original>
